<compile_context>
chip_gen: v6e
topology: v6e:2x2x1
jax: 0.10.0
libtpu: 0.0.40
codegen_flags: <defaults>
</compile_context>

<pallas_src>
import functools

import jax
import jax.numpy as jnp
from jax.experimental import pallas as pl
from jax.experimental.pallas import tpu as pltpu


def _rgcn_fused_kernel(a_ref, x_ref, w1_ref, b1_ref, w2_ref, b2_ref,
                       o_ref, xw_scratch, *, num_blocks, num_nodes, fp,
                       hidden):
    """Fused 2-layer RGCN.

    a_ref  : (N, (R+1)*N)   [A_1 | ... | A_R | I_N], mean-normalized adjacency
    x_ref  : (N, Fin)       input node features
    w1_ref : (Fin, (R+1)*FP)   per-relation + root weights, lane-padded blocks
    w2_ref : (H,   (R+1)*FP)   same for layer 2 (K = hidden, NOT padded)
    b*_ref : (1, FP)        bias (zero padded)
    o_ref  : (N, FP)        lane-dense padded output
    xw_scratch : ((R+1)*N, FP) VMEM scratch used to restack X@W_r along rows
    """
    a = a_ref[...]                                   # (N, (R+1)*N)

    def layer(feat, w_flat_ref, bias_ref):
        # One lane-dense matmul computes X @ W_r for every relation (and the
        # root weight as pseudo-relation R) at once.
        xw = jnp.dot(feat, w_flat_ref[...],
                     preferred_element_type=jnp.float32)   # (N, (R+1)*FP)
        # Restack (N, (R+1)*FP) -> ((R+1)*N, FP) via static, tile-aligned
        # slices (fp multiple of 128, num_nodes multiple of 8) so the
        # relation + root sum becomes the K dimension of a single MXU matmul.
        for r in range(num_blocks):
            xw_scratch[r * num_nodes:(r + 1) * num_nodes, :] = (
                xw[:, r * fp:(r + 1) * fp])
        msg = jnp.dot(a, xw_scratch[...],
                      preferred_element_type=jnp.float32)  # (N, FP)
        return msg + bias_ref[...]

    h = jnp.maximum(layer(x_ref[...], w1_ref, b1_ref), 0.0)   # (N, FP)
    # Layer-2 weights are packed with K = hidden, so feed only the real
    # hidden columns (cols >= hidden of h are exactly zero anyway).
    o_ref[...] = layer(h[:, :hidden], w2_ref, b2_ref)


def _pad_to(a, axis, size):
    assert size >= a.shape[axis], (
        f"cannot pad axis {axis} of shape {a.shape} to smaller size {size}")
    pad_width = [(0, 0)] * a.ndim
    pad_width[axis] = (0, size - a.shape[axis])
    return jnp.pad(a, pad_width)


# ---------------------------------------------------------------------------
# One-time packing (hoisted out of the per-call path)
# ---------------------------------------------------------------------------
def pack_rgcn_params(params, *, fp=128):
    """Pack RGCN weights once into lane-dense slabs for the fused kernel."""
    R, in_feat, hidden = params["w1"].shape
    out_feat = params["w2"].shape[2]
    assert fp % 128 == 0
    assert hidden <= fp and out_feat <= fp

    # Layer 1: blocks 0..R-1 = W_r (lane-padded), block R = W_root.
    w1 = _pad_to(params["w1"], 2, fp)                       # (R, Fin, FP)
    root1 = _pad_to(params["root1"], 1, fp)[None]           # (1, Fin, FP)
    w1_flat = (jnp.concatenate([w1, root1], axis=0)
               .transpose(1, 0, 2).reshape(in_feat, (R + 1) * fp))
    b1 = _pad_to(params["b1"], 0, fp).reshape(1, fp)

    # Layer 2: K dimension stays at `hidden` (sublane-aligned, no 128 pad).
    w2 = _pad_to(params["w2"], 2, fp)                       # (R, H, FP)
    root2 = _pad_to(params["root2"], 1, fp)[None]           # (1, H, FP)
    w2_flat = (jnp.concatenate([w2, root2], axis=0)
               .transpose(1, 0, 2).reshape(hidden, (R + 1) * fp))
    b2 = _pad_to(params["b2"], 0, fp).reshape(1, fp)

    return dict(w1_flat=w1_flat, b1=b1, w2_flat=w2_flat, b2=b2)


def build_norm_adj(src, dst, edge_type, num_nodes, num_rels):
    """Dense per-relation adjacency with mean normalization over incoming
    edges of each relation (matches PyG RGCNConv aggr='mean')."""
    adj = jnp.zeros((num_rels, num_nodes, num_nodes), jnp.float32)
    adj = adj.at[edge_type, dst, src].add(1.0)
    deg = jnp.sum(adj, axis=-1, keepdims=True)
    return adj / jnp.maximum(deg, 1.0)


def pack_adjacency(adj):
    """(R, N, N) -> (N, (R+1)*N): [A_1 | ... | A_R | I_N]; the identity block
    folds the root/self matmul into the relation-stacked MXU matmul."""
    R, N, _ = adj.shape
    a_cat = jnp.transpose(adj, (1, 0, 2)).reshape(N, R * N)
    return jnp.concatenate([a_cat, jnp.eye(N, dtype=adj.dtype)], axis=1)


# ---------------------------------------------------------------------------
# Forward (jitted; the only per-call work is the single fused pallas_call)
# ---------------------------------------------------------------------------
@functools.partial(jax.jit,
                   static_argnames=("num_rels", "hidden", "out_feat", "fp"))
def rgcn_forward(x, a_ext, w1_flat, b1, w2_flat, b2, *,
                 num_rels, hidden, out_feat, fp=128):
    """x: (N, Fin) f32, a_ext: (N, (R+1)*N) packed adjacency (pack_adjacency),
    w*/b*: packed weights (pack_rgcn_params). Returns (N, out_feat) f32."""
    N, in_feat = x.shape
    nb = num_rels + 1

    # Alignment guards: keep the restack lane/sublane aligned (store slot,
    # no XLU rotates) for any future sizes.
    assert fp % 128 == 0 and N % 8 == 0
    assert a_ext.shape == (N, nb * N)
    assert w1_flat.shape == (in_feat, nb * fp)
    assert w2_flat.shape == (hidden, nb * fp)

    kernel = functools.partial(_rgcn_fused_kernel, num_blocks=nb,
                               num_nodes=N, fp=fp, hidden=hidden)
    vmem = pltpu.MemorySpace.VMEM
    out_padded = pl.pallas_call(
        kernel,
        out_shape=jax.ShapeDtypeStruct((N, fp), jnp.float32),
        in_specs=[pl.BlockSpec(memory_space=vmem)] * 6,
        out_specs=pl.BlockSpec(memory_space=vmem),
        scratch_shapes=[pltpu.VMEM((nb * N, fp), jnp.float32)],
    )(a_ext, x, w1_flat, b1, w2_flat, b2)

    return out_padded[:, :out_feat]


# ---------------------------------------------------------------------------
# Plain-JAX reference
# ---------------------------------------------------------------------------
def rgcn_layer_ref(adj, x, w, w_root, bias):
    agg = jnp.einsum("rnm,mf->rnf", adj, x)
    msg = jnp.einsum("rnf,rfo->no", agg, w)
    return msg + x @ w_root + bias


if __name__ == "__main__":
    key = jax.random.PRNGKey(0)
    N, E, R = 32, 96, 4                     # nodes, edges, relations
    in_feat, hidden_feat, out_feat = 64, 32, 16

    k = jax.random.split(key, 8)
    x = jax.random.normal(k[0], (N, in_feat), jnp.float32)
    src = jax.random.randint(k[1], (E,), 0, N)
    dst = jax.random.randint(k[2], (E,), 0, N)
    edge_type = jax.random.randint(k[3], (E,), 0, R)
    adj = build_norm_adj(src, dst, edge_type, N, R)

    def glorot(kk, shape):
        fan_in, fan_out = shape[-2], shape[-1]
        limit = (6.0 / (fan_in + fan_out)) ** 0.5
        return jax.random.uniform(kk, shape, jnp.float32, -limit, limit)

    params = dict(
        w1=glorot(k[4], (R, in_feat, hidden_feat)),
        root1=glorot(k[5], (in_feat, hidden_feat)),
        b1=jnp.zeros((hidden_feat,), jnp.float32),
        w2=glorot(k[6], (R, hidden_feat, out_feat)),
        root2=glorot(k[7], (hidden_feat, out_feat)),
        b2=jnp.zeros((out_feat,), jnp.float32),
    )

    # --- one-time packing, hoisted out of the per-call path ----------------
    packed = pack_rgcn_params(params, fp=128)
    a_ext = pack_adjacency(adj)

    out = jax.block_until_ready(
        rgcn_forward(x, a_ext, packed["w1_flat"], packed["b1"],
                     packed["w2_flat"], packed["b2"],
                     num_rels=R, hidden=hidden_feat, out_feat=out_feat,
                     fp=128))

    h_ref = jax.nn.relu(
        rgcn_layer_ref(adj, x, params["w1"], params["root1"], params["b1"]))
    out_ref = rgcn_layer_ref(adj, h_ref, params["w2"], params["root2"],
                             params["b2"])
    assert out.shape == (N, out_feat)
    assert jnp.allclose(out, out_ref, atol=1e-4, rtol=1e-4), "mismatch vs ref"
    print("KERNEL_OK")
</pallas_src>

<mosaic_0001>
module attributes {stable_mosaic.version = 11 : i64} {
  func.func @_rgcn_fused_kernel(%arg0: memref<32x160xf32, #tpu.memory_space<vmem>>, %arg1: memref<32x64xf32, #tpu.memory_space<vmem>>, %arg2: memref<64x640xf32, #tpu.memory_space<vmem>>, %arg3: memref<1x128xf32, #tpu.memory_space<vmem>>, %arg4: memref<32x640xf32, #tpu.memory_space<vmem>>, %arg5: memref<1x128xf32, #tpu.memory_space<vmem>>, %arg6: memref<32x128xf32, #tpu.memory_space<vmem>>, %arg7: memref<160x128xf32, #tpu.memory_space<vmem>>) attributes {dimension_semantics = [], scalar_prefetch = 0 : i64, scratch_operands = 1 : i64, tpu.core_type = #tpu.core_type<tc>} {
    %c0 = arith.constant 0 : index
    %c0_0 = arith.constant 0 : index
    %0 = vector.load %arg0[%c0, %c0_0] : memref<32x160xf32, #tpu.memory_space<vmem>>, vector<32x160xf32>
    %c0_1 = arith.constant 0 : index
    %c0_2 = arith.constant 0 : index
    %1 = vector.load %arg1[%c0_1, %c0_2] : memref<32x64xf32, #tpu.memory_space<vmem>>, vector<32x64xf32>
    %c0_3 = arith.constant 0 : index
    %c0_4 = arith.constant 0 : index
    %2 = vector.load %arg2[%c0_3, %c0_4] : memref<64x640xf32, #tpu.memory_space<vmem>>, vector<64x640xf32>
    %cst = arith.constant dense<0.000000e+00> : vector<32x640xf32>
    %3 = tpu.matmul %1, %2, %cst {dimension_numbers = #tpu.dot_dimension_numbers<[1], [0], [0], [1], [0, 0, 1, 1], [], []>} : vector<32x64xf32>, vector<64x640xf32>, vector<32x640xf32> -> vector<32x640xf32>
    %4 = vector.extract_strided_slice %3 {offsets = [0, 0], sizes = [32, 128], strides = [1, 1]} : vector<32x640xf32> to vector<32x128xf32>
    %c0_5 = arith.constant 0 : index
    %c0_6 = arith.constant 0 : index
    %5 = vector.load %arg7[%c0_5, %c0_6] : memref<160x128xf32, #tpu.memory_space<vmem>>, vector<32x128xf32>
    tpu.vector_store %arg7[%c0_5, %c0_6], %4 {strides = array<i32>} : memref<160x128xf32, #tpu.memory_space<vmem>>, vector<32x128xf32>,
    %6 = vector.extract_strided_slice %3 {offsets = [0, 128], sizes = [32, 128], strides = [1, 1]} : vector<32x640xf32> to vector<32x128xf32>
    %c32 = arith.constant 32 : index
    %c0_7 = arith.constant 0 : index
    %7 = vector.load %arg7[%c32, %c0_7] : memref<160x128xf32, #tpu.memory_space<vmem>>, vector<32x128xf32>
    tpu.vector_store %arg7[%c32, %c0_7], %6 {strides = array<i32>} : memref<160x128xf32, #tpu.memory_space<vmem>>, vector<32x128xf32>,
    %8 = vector.extract_strided_slice %3 {offsets = [0, 256], sizes = [32, 128], strides = [1, 1]} : vector<32x640xf32> to vector<32x128xf32>
    %c64 = arith.constant 64 : index
    %c0_8 = arith.constant 0 : index
    %9 = vector.load %arg7[%c64, %c0_8] : memref<160x128xf32, #tpu.memory_space<vmem>>, vector<32x128xf32>
    tpu.vector_store %arg7[%c64, %c0_8], %8 {strides = array<i32>} : memref<160x128xf32, #tpu.memory_space<vmem>>, vector<32x128xf32>,
    %10 = vector.extract_strided_slice %3 {offsets = [0, 384], sizes = [32, 128], strides = [1, 1]} : vector<32x640xf32> to vector<32x128xf32>
    %c96 = arith.constant 96 : index
    %c0_9 = arith.constant 0 : index
    %11 = vector.load %arg7[%c96, %c0_9] : memref<160x128xf32, #tpu.memory_space<vmem>>, vector<32x128xf32>
    tpu.vector_store %arg7[%c96, %c0_9], %10 {strides = array<i32>} : memref<160x128xf32, #tpu.memory_space<vmem>>, vector<32x128xf32>,
    %12 = vector.extract_strided_slice %3 {offsets = [0, 512], sizes = [32, 128], strides = [1, 1]} : vector<32x640xf32> to vector<32x128xf32>
    %c128 = arith.constant 128 : index
    %c0_10 = arith.constant 0 : index
    %13 = vector.load %arg7[%c128, %c0_10] : memref<160x128xf32, #tpu.memory_space<vmem>>, vector<32x128xf32>
    tpu.vector_store %arg7[%c128, %c0_10], %12 {strides = array<i32>} : memref<160x128xf32, #tpu.memory_space<vmem>>, vector<32x128xf32>,
    %c0_11 = arith.constant 0 : index
    %c0_12 = arith.constant 0 : index
    %14 = vector.load %arg7[%c0_11, %c0_12] : memref<160x128xf32, #tpu.memory_space<vmem>>, vector<160x128xf32>
    %cst_13 = arith.constant dense<0.000000e+00> : vector<32x128xf32>
    %15 = tpu.matmul %0, %14, %cst_13 {dimension_numbers = #tpu.dot_dimension_numbers<[1], [0], [0], [1], [0, 0, 1, 1], [], []>} : vector<32x160xf32>, vector<160x128xf32>, vector<32x128xf32> -> vector<32x128xf32>
    %c0_14 = arith.constant 0 : index
    %c0_15 = arith.constant 0 : index
    %16 = vector.load %arg3[%c0_14, %c0_15] : memref<1x128xf32, #tpu.memory_space<vmem>>, vector<1x128xf32>
    %17 = vector.broadcast %16 : vector<1x128xf32> to vector<32x128xf32>
    %18 = arith.addf %15, %17 : vector<32x128xf32>
    %cst_16 = arith.constant 0.000000e+00 : f32
    %19 = vector.broadcast %cst_16 : f32 to vector<32x128xf32>
    %20 = arith.maximumf %18, %19 : vector<32x128xf32>
    %21 = vector.extract_strided_slice %20 {offsets = [0, 0], sizes = [32, 32], strides = [1, 1]} : vector<32x128xf32> to vector<32x32xf32>
    %c0_17 = arith.constant 0 : index
    %c0_18 = arith.constant 0 : index
    %22 = vector.load %arg4[%c0_17, %c0_18] : memref<32x640xf32, #tpu.memory_space<vmem>>, vector<32x640xf32>
    %cst_19 = arith.constant dense<0.000000e+00> : vector<32x640xf32>
    %23 = tpu.matmul %21, %22, %cst_19 {dimension_numbers = #tpu.dot_dimension_numbers<[1], [0], [0], [1], [0, 0, 1, 1], [], []>} : vector<32x32xf32>, vector<32x640xf32>, vector<32x640xf32> -> vector<32x640xf32>
    %24 = vector.extract_strided_slice %23 {offsets = [0, 0], sizes = [32, 128], strides = [1, 1]} : vector<32x640xf32> to vector<32x128xf32>
    %c0_20 = arith.constant 0 : index
    %c0_21 = arith.constant 0 : index
    %25 = vector.load %arg7[%c0_20, %c0_21] : memref<160x128xf32, #tpu.memory_space<vmem>>, vector<32x128xf32>
    tpu.vector_store %arg7[%c0_20, %c0_21], %24 {strides = array<i32>} : memref<160x128xf32, #tpu.memory_space<vmem>>, vector<32x128xf32>,
    %26 = vector.extract_strided_slice %23 {offsets = [0, 128], sizes = [32, 128], strides = [1, 1]} : vector<32x640xf32> to vector<32x128xf32>
    %c32_22 = arith.constant 32 : index
    %c0_23 = arith.constant 0 : index
    %27 = vector.load %arg7[%c32_22, %c0_23] : memref<160x128xf32, #tpu.memory_space<vmem>>, vector<32x128xf32>
    tpu.vector_store %arg7[%c32_22, %c0_23], %26 {strides = array<i32>} : memref<160x128xf32, #tpu.memory_space<vmem>>, vector<32x128xf32>,
    %28 = vector.extract_strided_slice %23 {offsets = [0, 256], sizes = [32, 128], strides = [1, 1]} : vector<32x640xf32> to vector<32x128xf32>
    %c64_24 = arith.constant 64 : index
    %c0_25 = arith.constant 0 : index
    %29 = vector.load %arg7[%c64_24, %c0_25] : memref<160x128xf32, #tpu.memory_space<vmem>>, vector<32x128xf32>
    tpu.vector_store %arg7[%c64_24, %c0_25], %28 {strides = array<i32>} : memref<160x128xf32, #tpu.memory_space<vmem>>, vector<32x128xf32>,
    %30 = vector.extract_strided_slice %23 {offsets = [0, 384], sizes = [32, 128], strides = [1, 1]} : vector<32x640xf32> to vector<32x128xf32>
    %c96_26 = arith.constant 96 : index
    %c0_27 = arith.constant 0 : index
    %31 = vector.load %arg7[%c96_26, %c0_27] : memref<160x128xf32, #tpu.memory_space<vmem>>, vector<32x128xf32>
    tpu.vector_store %arg7[%c96_26, %c0_27], %30 {strides = array<i32>} : memref<160x128xf32, #tpu.memory_space<vmem>>, vector<32x128xf32>,
    %32 = vector.extract_strided_slice %23 {offsets = [0, 512], sizes = [32, 128], strides = [1, 1]} : vector<32x640xf32> to vector<32x128xf32>
    %c128_28 = arith.constant 128 : index
    %c0_29 = arith.constant 0 : index
    %33 = vector.load %arg7[%c128_28, %c0_29] : memref<160x128xf32, #tpu.memory_space<vmem>>, vector<32x128xf32>
    tpu.vector_store %arg7[%c128_28, %c0_29], %32 {strides = array<i32>} : memref<160x128xf32, #tpu.memory_space<vmem>>, vector<32x128xf32>,
    %c0_30 = arith.constant 0 : index
    %c0_31 = arith.constant 0 : index
    %34 = vector.load %arg7[%c0_30, %c0_31] : memref<160x128xf32, #tpu.memory_space<vmem>>, vector<160x128xf32>
    %cst_32 = arith.constant dense<0.000000e+00> : vector<32x128xf32>
    %35 = tpu.matmul %0, %34, %cst_32 {dimension_numbers = #tpu.dot_dimension_numbers<[1], [0], [0], [1], [0, 0, 1, 1], [], []>} : vector<32x160xf32>, vector<160x128xf32>, vector<32x128xf32> -> vector<32x128xf32>
    %c0_33 = arith.constant 0 : index
    %c0_34 = arith.constant 0 : index
    %36 = vector.load %arg5[%c0_33, %c0_34] : memref<1x128xf32, #tpu.memory_space<vmem>>, vector<1x128xf32>
    %37 = vector.broadcast %36 : vector<1x128xf32> to vector<32x128xf32>
    %38 = arith.addf %35, %37 : vector<32x128xf32>
    %c0_35 = arith.constant 0 : index
    %c0_36 = arith.constant 0 : index
    %39 = vector.load %arg6[%c0_35, %c0_36] : memref<32x128xf32, #tpu.memory_space<vmem>>, vector<32x128xf32>
    tpu.vector_store %arg6[%c0_35, %c0_36], %38 {strides = array<i32>} : memref<32x128xf32, #tpu.memory_space<vmem>>, vector<32x128xf32>,
    return
  }
}

</mosaic_0001>

<llo_original>
// kernel: rgcn_forward.1
$region0: #{rgcn_forward.1}
  #allocation0 [shape = 'u32[]', space=smem, size = 0x4, offset = 0x4, fixed_abs, tag = 'smem constant byte address 0x4 - core index']
  #allocation1 [shape = 'u32[144,128]{1,0:T(1,128)}', space=vmem, size = 0x12000, scoped, tag = 'internal scratch']
  #allocation2 [shape = 'f32[160,128]{1,0:T(8,128)}', space=vmem, size = 0x14000, scoped, tag = 'scratch operand']
  %s0 = inlined_call_operand.hbm [shape: f32[32,160], index: 0, kind: input, shape index: {}]
  %s1 = inlined_call_operand.hbm [shape: f32[32,64], index: 1, kind: input, shape index: {}]
  %s2 = inlined_call_operand.hbm [shape: f32[64,640], index: 2, kind: input, shape index: {}]
  %s3 = inlined_call_operand.vmem [shape: f32[1,128], index: 3, kind: input, shape index: {}]
  %s4 = inlined_call_operand.hbm [shape: f32[32,640], index: 4, kind: input, shape index: {}]
  %s5 = inlined_call_operand.vmem [shape: f32[1,128], index: 5, kind: input, shape index: {}]
  %s6 = inlined_call_operand.vmem [shape: f32[32,128], index: 6, kind: output, shape index: {}]
  %s7 = sld [smem:[#allocation0]]
  $region50: #{rgcn_forward.1} parent=0
    _
  %s9 = ssub.s32 1, %s7
  %s10 = scalar_select 0, %s9, %s7
  $region1: #{rgcn_forward.1} parent=0
    #allocation3 [shape = 'u8[32768]{0}', space=vmem, size = 0x8000, scoped, tag = 'input window, operand 0, single buffered']
    #allocation4 [shape = 's32[1]{0}', space=sflag, size = 0x4, scoped, tag = 'scoped memory for rgcn_forward.1']
    #allocation5 [shape = 'u8[16384]{0}', space=vmem, size = 0x4000, scoped, tag = 'input window, operand 1, single buffered']
    #allocation6 [shape = 's32[1]{0}', space=sflag, size = 0x4, scoped, tag = 'scoped memory for rgcn_forward.1']
    #allocation7 [shape = 'u8[163840]{0}', space=vmem, size = 0x28000, scoped, tag = 'input window, operand 2, single buffered']
    #allocation8 [shape = 'u8[81920]{0}', space=vmem, size = 0x14000, scoped, tag = 'input window, operand 4, single buffered']
    #allocation9 [shape = 's32[1]{0}', space=sflag, size = 0x4, scoped, tag = 'scoped memory for rgcn_forward.1']
    %11 = vsyncpa [#allocation4], 0
    %12 = vsyncpa [#allocation6], 0
    %13 = vsyncpa [#allocation9], 0
    // Predicated region
    $region2: #{rgcn_forward.1} parent=1 // pred_check
      _
    $region3: #{rgcn_forward.1} parent=1 // pred_check_branch
      %15 = sbr.rel (0) target = $region5
    $region4: #{rgcn_forward.1} parent=1 // pred_region
      %s17 = ssub.s32 1024, 1024
      %18 = vsyncadd [#allocation4], %s17
      %s19 = sshll.u32 [#allocation3], 4
      %s20 = int_to_ptr.vmem [resolvable:$true] %s19
      %25 = dma.hbm_to_vmem [thread:$0]  %s0, 1024, %s20, [#allocation4], 256, 256, 16
    $region5: #{rgcn_forward.1} parent=1 // pred_fallthru
      _
    // Predicated region
    $region6: #{rgcn_forward.1} parent=1 // pred_check
      _
    $region7: #{rgcn_forward.1} parent=1 // pred_check_branch
      %27 = sbr.rel (0) target = $region9
    $region8: #{rgcn_forward.1} parent=1 // pred_region
      %s29 = ssub.s32 512, 512
      %30 = vsyncadd [#allocation6], %s29
      %s31 = sshll.u32 [#allocation5], 4
      %s32 = int_to_ptr.vmem [resolvable:$true] %s31
      %37 = dma.hbm_to_vmem [thread:$0]  %s1, 512, %s32, [#allocation6], 128, 128, 8
    $region9: #{rgcn_forward.1} parent=1 // pred_fallthru
      _
    // Predicated region
    $region10: #{rgcn_forward.1} parent=1 // pred_check
      _
    $region11: #{rgcn_forward.1} parent=1 // pred_check_branch
      %39 = sbr.rel (0) target = $region13
    $region12: #{rgcn_forward.1} parent=1 // pred_region
      %s41 = ssub.s32 5120, 5120
      %42 = vsyncadd [#allocation6], %s41
      %s43 = sshll.u32 [#allocation7], 4
      %s44 = int_to_ptr.vmem [resolvable:$true] %s43
      %49 = dma.hbm_to_vmem [thread:$0]  %s2, 5120, %s44, [#allocation6], 640, 640, 40
    $region13: #{rgcn_forward.1} parent=1 // pred_fallthru
      _
    // Predicated region
    $region14: #{rgcn_forward.1} parent=1 // pred_check
      _
    $region15: #{rgcn_forward.1} parent=1 // pred_check_branch
      %51 = sbr.rel (0) target = $region17
    $region16: #{rgcn_forward.1} parent=1 // pred_region
      _
    $region17: #{rgcn_forward.1} parent=1 // pred_fallthru
      _
    // Predicated region
    $region18: #{rgcn_forward.1} parent=1 // pred_check
      _
    $region19: #{rgcn_forward.1} parent=1 // pred_check_branch
      %53 = sbr.rel (0) target = $region21
    $region20: #{rgcn_forward.1} parent=1 // pred_region
      %s55 = ssub.s32 2560, 2560
      %56 = vsyncadd [#allocation9], %s55
      %s57 = sshll.u32 [#allocation8], 4
      %s58 = int_to_ptr.vmem [resolvable:$true] %s57
      %63 = dma.hbm_to_vmem [thread:$0]  %s4, 2560, %s58, [#allocation9], 640, 640, 40
    $region21: #{rgcn_forward.1} parent=1 // pred_fallthru
      _
    // Predicated region
    $region22: #{rgcn_forward.1} parent=1 // pred_check
      _
    $region23: #{rgcn_forward.1} parent=1 // pred_check_branch
      %65 = sbr.rel (0) target = $region25
    $region24: #{rgcn_forward.1} parent=1 // pred_region
      _
    $region25: #{rgcn_forward.1} parent=1 // pred_fallthru
      _
    // Predicated region
    $region26: #{rgcn_forward.1} parent=1 // pred_check
      _
    $region27: #{rgcn_forward.1} parent=1 // pred_check_branch
      %67 = sbr.rel (0) target = $region29
    $region28: #{rgcn_forward.1} parent=1 // pred_region
      %68 = dma.done [#allocation4], 1024
    $region29: #{rgcn_forward.1} parent=1 // pred_fallthru
      _
    // Predicated region
    $region30: #{rgcn_forward.1} parent=1 // pred_check
      _
    $region31: #{rgcn_forward.1} parent=1 // pred_check_branch
      %70 = sbr.rel (0) target = $region33
    $region32: #{rgcn_forward.1} parent=1 // pred_region
      %71 = dma.done [#allocation6], 512
    $region33: #{rgcn_forward.1} parent=1 // pred_fallthru
      _
    // Predicated region
    $region34: #{rgcn_forward.1} parent=1 // pred_check
      _
    $region35: #{rgcn_forward.1} parent=1 // pred_check_branch
      %73 = sbr.rel (0) target = $region37
    $region36: #{rgcn_forward.1} parent=1 // pred_region
      %74 = dma.done [#allocation6], 5120
    $region37: #{rgcn_forward.1} parent=1 // pred_fallthru
      _
    // Predicated region
    $region38: #{rgcn_forward.1} parent=1 // pred_check
      _
    $region39: #{rgcn_forward.1} parent=1 // pred_check_branch
      %76 = sbr.rel (0) target = $region41
    $region40: #{rgcn_forward.1} parent=1 // pred_region
      %77 = dma.done [#allocation9], 2560
    $region41: #{rgcn_forward.1} parent=1 // pred_fallthru
      _
    %v78 = vld [vmem:[#allocation3] sm:$0xff]
    %v79 = vld [vmem:[#allocation3 + $0x8] sm:$0xff]
    %v80 = vld [vmem:[#allocation3 + $0x10] sm:$0xff]
    %v81 = vld [vmem:[#allocation3 + $0x18] sm:$0xff]
    %v82 = vld [vmem:[#allocation3 + $0x20] sm:$0xff]
    %v83 = vld [vmem:[#allocation3 + $0x28] sm:$0xff]
    %v84 = vld [vmem:[#allocation3 + $0x30] sm:$0xff]
    %v85 = vld [vmem:[#allocation3 + $0x38] sm:$0xff]
    %v86 = vld [vmem:[#allocation5] sm:$0xff]
    %v87 = vld [vmem:[#allocation5 + $0x8] sm:$0xff]
    %v88 = vld [vmem:[#allocation5 + $0x10] sm:$0xff]
    %v89 = vld [vmem:[#allocation5 + $0x18] sm:$0xff]
    %v90 = vld [vmem:[#allocation7] sm:$0xff]
    %v91 = vld [vmem:[#allocation7 + $0x8] sm:$0xff]
    %v92 = vld [vmem:[#allocation7 + $0x10] sm:$0xff]
    %v93 = vld [vmem:[#allocation7 + $0x18] sm:$0xff]
    %v94 = vld [vmem:[#allocation7 + $0x20] sm:$0xff]
    %v95 = vld [vmem:[#allocation7 + $0x28] sm:$0xff]
    %v96 = vld [vmem:[#allocation7 + $0x30] sm:$0xff]
    %v97 = vld [vmem:[#allocation7 + $0x38] sm:$0xff]
    %v98 = vld [vmem:[#allocation7 + $0x40] sm:$0xff]
    %v99 = vld [vmem:[#allocation7 + $0x48] sm:$0xff]
    %v100 = vld [vmem:[#allocation7 + $0x50] sm:$0xff]
    %v101 = vld [vmem:[#allocation7 + $0x58] sm:$0xff]
    %v102 = vld [vmem:[#allocation7 + $0x60] sm:$0xff]
    %v103 = vld [vmem:[#allocation7 + $0x68] sm:$0xff]
    %v104 = vld [vmem:[#allocation7 + $0x70] sm:$0xff]
    %v105 = vld [vmem:[#allocation7 + $0x78] sm:$0xff]
    %v106 = vld [vmem:[#allocation7 + $0x80] sm:$0xff]
    %v107 = vld [vmem:[#allocation7 + $0x88] sm:$0xff]
    %v108 = vld [vmem:[#allocation7 + $0x90] sm:$0xff]
    %v109 = vld [vmem:[#allocation7 + $0x98] sm:$0xff]
    %v110 = vld [vmem:[#allocation7 + $0xa0] sm:$0xff]
    %v111 = vld [vmem:[#allocation7 + $0xa8] sm:$0xff]
    %v112 = vld [vmem:[#allocation7 + $0xb0] sm:$0xff]
    %v113 = vld [vmem:[#allocation7 + $0xb8] sm:$0xff]
    %v114 = vld [vmem:[#allocation7 + $0xc0] sm:$0xff]
    %v115 = vld [vmem:[#allocation7 + $0xc8] sm:$0xff]
    %v116 = vld [vmem:[#allocation7 + $0xd0] sm:$0xff]
    %v117 = vld [vmem:[#allocation7 + $0xd8] sm:$0xff]
    %v118 = vld [vmem:[#allocation7 + $0xe0] sm:$0xff]
    %v119 = vld [vmem:[#allocation7 + $0xe8] sm:$0xff]
    %v120 = vld [vmem:[#allocation7 + $0xf0] sm:$0xff]
    %v121 = vld [vmem:[#allocation7 + $0xf8] sm:$0xff]
    %v122 = vld [vmem:[#allocation7 + $0x100] sm:$0xff]
    %v123 = vld [vmem:[#allocation7 + $0x108] sm:$0xff]
    %v124 = vld [vmem:[#allocation7 + $0x110] sm:$0xff]
    %v125 = vld [vmem:[#allocation7 + $0x118] sm:$0xff]
    %v126 = vld [vmem:[#allocation7 + $0x120] sm:$0xff]
    %v127 = vld [vmem:[#allocation7 + $0x128] sm:$0xff]
    %v128 = vld [vmem:[#allocation7 + $0x130] sm:$0xff]
    %v129 = vld [vmem:[#allocation7 + $0x138] sm:$0xff]
    %vm130 = vcmask 523264
    %v132 = vsel %vm130, %v86, 0
    %v135 = vsel %vm130, %v87, 0
    %v138 = vsel %vm130, %v88, 0
    %v141 = vsel %vm130, %v89, 0
    %143 = vmatprep.subr.mxu0 0.0
    %144 = vmatpush1.msra.mxu0 0.0
    %145 = vmatprep.subr.mxu0 0.0
    %146 = vmatpush1.msra.mxu0 0.0
    %147 = vmatprep.subr.mxu0 0.0
    %148 = vmatpush1.msra.mxu0 0.0
    %149 = vmatprep.subr.mxu0 0.0
    %150 = vmatpush1.msra.mxu0 0.0
    %151 = vmatprep.subr.mxu0 0.0
    %152 = vmatpush1.msra.mxu0 0.0
    %153 = vmatprep.subr.mxu0 0.0
    %154 = vmatpush1.msra.mxu0 0.0
    %155 = vmatprep.subr.mxu0 0.0
    %156 = vmatpush1.msra.mxu0 0.0
    %157 = vmatprep.subr.mxu0 0.0
    %158 = vmatpush1.msra.mxu0 0.0
    %159 = vmatprep.subr.mxu0 %v126
    %160 = vmatpush1.msra.mxu0 %v125
    %161 = vmatprep.subr.mxu0 %v121
    %162 = vmatpush1.msra.mxu0 %v120
    %163 = vmatprep.subr.mxu0 %v116
    %164 = vmatpush1.msra.mxu0 %v115
    %165 = vmatprep.subr.mxu0 %v111
    %166 = vmatpush1.msra.mxu0 %v110
    %167 = vmatprep.subr.mxu0 %v106
    %168 = vmatpush1.msra.mxu0 %v105
    %169 = vmatprep.subr.mxu0 %v101
    %170 = vmatpush1.msra.mxu0 %v100
    %171 = vmatprep.subr.mxu0 %v96
    %172 = vmatpush1.msra.mxu0 %v95
    %173 = vmatprep.subr.mxu0 %v91
    %174 = vmatpush1.msra.mxu0 %v90
    %175 = vmatprep.subr.mxu0 0.0
    %176 = vmatpush2.msra.mxu0 0.0
    %177 = vmatprep.subr.mxu0 0.0
    %178 = vmatpush2.msra.mxu0 0.0
    %179 = vmatprep.subr.mxu0 0.0
    %180 = vmatpush2.msra.mxu0 0.0
    %181 = vmatprep.subr.mxu0 0.0
    %182 = vmatpush2.msra.mxu0 0.0
    %183 = vmatprep.subr.mxu0 0.0
    %184 = vmatpush2.msra.mxu0 0.0
    %185 = vmatprep.subr.mxu0 0.0
    %186 = vmatpush2.msra.mxu0 0.0
    %187 = vmatprep.subr.mxu0 0.0
    %188 = vmatpush2.msra.mxu0 0.0
    %189 = vmatprep.subr.mxu0 0.0
    %190 = vmatpush2.msra.mxu0 0.0
    %191 = vmatprep.subr.mxu0 0.0
    %192 = vmatpush2.msra.mxu0 0.0
    %193 = vmatprep.subr.mxu0 0.0
    %194 = vmatpush2.msra.mxu0 0.0
    %195 = vmatprep.subr.mxu0 0.0
    %196 = vmatpush2.msra.mxu0 0.0
    %197 = vmatprep.subr.mxu0 0.0
    %198 = vmatpush2.msra.mxu0 0.0
    %199 = vmatprep.subr.mxu0 0.0
    %200 = vmatpush2.msra.mxu0 0.0
    %201 = vmatprep.subr.mxu0 0.0
    %202 = vmatpush2.msra.mxu0 0.0
    %203 = vmatprep.subr.mxu0 0.0
    %204 = vmatpush2.msra.mxu0 0.0
    %205 = vmatprep.subr.mxu0 0.0
    %206 = vmatpush2.msra.mxu0 0.0
    %207 = vmatprep.mubr.f32.mxu0 0.0
    %208 = vmatmul.mubr.f32.gmra.mxu0 %v132
    %v209 = vpop.f32.mrf.mxu0
    %v210 = vadd.f32 0.0, %v209
    %v211 = vpop.f32.mrf.mxu0
    %v212 = vadd.f32 0.0, %v211
    %213 = vmatprep.mubr.f32.mxu0 0.0
    %214 = vmatmul.mubr.f32.gmra.mxu0 %v135
    %v215 = vpop.f32.mrf.mxu0
    %v216 = vadd.f32 0.0, %v215
    %v217 = vpop.f32.mrf.mxu0
    %v218 = vadd.f32 0.0, %v217
    %219 = vmatprep.mubr.f32.mxu0 0.0
    %220 = vmatmul.mubr.f32.gmra.mxu0 %v138
    %v221 = vpop.f32.mrf.mxu0
    %v222 = vadd.f32 0.0, %v221
    %v223 = vpop.f32.mrf.mxu0
    %v224 = vadd.f32 0.0, %v223
    %225 = vmatprep.mubr.f32.mxu0 0.0
    %226 = vmatmul.mubr.f32.gmra.mxu0 %v141
    %v227 = vpop.f32.mrf.mxu0
    %v228 = vadd.f32 0.0, %v227
    %v229 = vpop.f32.mrf.mxu0
    %v230 = vadd.f32 0.0, %v229
    %231 = vdwg.mxu0
    %232 = vmatprep.subr.mxu0 0.0
    %233 = vmatpush1.msra.mxu0 0.0
    %234 = vmatprep.subr.mxu0 0.0
    %235 = vmatpush1.msra.mxu0 0.0
    %236 = vmatprep.subr.mxu0 0.0
    %237 = vmatpush1.msra.mxu0 0.0
    %238 = vmatprep.subr.mxu0 0.0
    %239 = vmatpush1.msra.mxu0 0.0
    %240 = vmatprep.subr.mxu0 0.0
    %241 = vmatpush1.msra.mxu0 0.0
    %242 = vmatprep.subr.mxu0 0.0
    %243 = vmatpush1.msra.mxu0 0.0
    %244 = vmatprep.subr.mxu0 0.0
    %245 = vmatpush1.msra.mxu0 0.0
    %246 = vmatprep.subr.mxu0 0.0
    %247 = vmatpush1.msra.mxu0 0.0
    %248 = vmatprep.subr.mxu0 %v128
    %249 = vmatpush1.msra.mxu0 %v127
    %250 = vmatprep.subr.mxu0 %v123
    %251 = vmatpush1.msra.mxu0 %v122
    %252 = vmatprep.subr.mxu0 %v118
    %253 = vmatpush1.msra.mxu0 %v117
    %254 = vmatprep.subr.mxu0 %v113
    %255 = vmatpush1.msra.mxu0 %v112
    %256 = vmatprep.subr.mxu0 %v108
    %257 = vmatpush1.msra.mxu0 %v107
    %258 = vmatprep.subr.mxu0 %v103
    %259 = vmatpush1.msra.mxu0 %v102
    %260 = vmatprep.subr.mxu0 %v98
    %261 = vmatpush1.msra.mxu0 %v97
    %262 = vmatprep.subr.mxu0 %v93
    %263 = vmatpush1.msra.mxu0 %v92
    %264 = vmatprep.subr.mxu0 0.0
    %265 = vmatpush2.msra.mxu0 0.0
    %266 = vmatprep.subr.mxu0 0.0
    %267 = vmatpush2.msra.mxu0 0.0
    %268 = vmatprep.subr.mxu0 0.0
    %269 = vmatpush2.msra.mxu0 0.0
    %270 = vmatprep.subr.mxu0 0.0
    %271 = vmatpush2.msra.mxu0 0.0
    %272 = vmatprep.subr.mxu0 0.0
    %273 = vmatpush2.msra.mxu0 0.0
    %274 = vmatprep.subr.mxu0 0.0
    %275 = vmatpush2.msra.mxu0 0.0
    %276 = vmatprep.subr.mxu0 0.0
    %277 = vmatpush2.msra.mxu0 0.0
    %278 = vmatprep.subr.mxu0 0.0
    %279 = vmatpush2.msra.mxu0 0.0
    %280 = vmatprep.subr.mxu0 0.0
    %281 = vmatpush2.msra.mxu0 0.0
    %282 = vmatprep.subr.mxu0 0.0
    %283 = vmatpush2.msra.mxu0 0.0
    %284 = vmatprep.subr.mxu0 0.0
    %285 = vmatpush2.msra.mxu0 0.0
    %286 = vmatprep.subr.mxu0 0.0
    %287 = vmatpush2.msra.mxu0 0.0
    %288 = vmatprep.subr.mxu0 0.0
    %289 = vmatpush2.msra.mxu0 0.0
    %290 = vmatprep.subr.mxu0 0.0
    %291 = vmatpush2.msra.mxu0 0.0
    %292 = vmatprep.subr.mxu0 0.0
    %293 = vmatpush2.msra.mxu0 0.0
    %294 = vmatprep.subr.mxu0 0.0
    %295 = vmatpush2.msra.mxu0 0.0
    %296 = vmatprep.mubr.f32.mxu0 0.0
    %297 = vmatmul.mubr.f32.gmra.mxu0 %v132
    %v298 = vpop.f32.mrf.mxu0
    %v299 = vadd.f32 0.0, %v298
    %v300 = vpop.f32.mrf.mxu0
    %v301 = vadd.f32 0.0, %v300
    %302 = vmatprep.mubr.f32.mxu0 0.0
    %303 = vmatmul.mubr.f32.gmra.mxu0 %v135
    %v304 = vpop.f32.mrf.mxu0
    %v305 = vadd.f32 0.0, %v304
    %v306 = vpop.f32.mrf.mxu0
    %v307 = vadd.f32 0.0, %v306
    %308 = vmatprep.mubr.f32.mxu0 0.0
    %309 = vmatmul.mubr.f32.gmra.mxu0 %v138
    %v310 = vpop.f32.mrf.mxu0
    %v311 = vadd.f32 0.0, %v310
    %v312 = vpop.f32.mrf.mxu0
    %v313 = vadd.f32 0.0, %v312
    %314 = vmatprep.mubr.f32.mxu0 0.0
    %315 = vmatmul.mubr.f32.gmra.mxu0 %v141
    %v316 = vpop.f32.mrf.mxu0
    %v317 = vadd.f32 0.0, %v316
    %v318 = vpop.f32.mrf.mxu0
    %v319 = vadd.f32 0.0, %v318
    %320 = vdwg.mxu0
    %321 = vmatprep.subr.mxu0 0.0
    %322 = vmatpush1.msra.mxu0 0.0
    %323 = vmatprep.subr.mxu0 0.0
    %324 = vmatpush1.msra.mxu0 0.0
    %325 = vmatprep.subr.mxu0 0.0
    %326 = vmatpush1.msra.mxu0 0.0
    %327 = vmatprep.subr.mxu0 0.0
    %328 = vmatpush1.msra.mxu0 0.0
    %329 = vmatprep.subr.mxu0 0.0
    %330 = vmatpush1.msra.mxu0 0.0
    %331 = vmatprep.subr.mxu0 0.0
    %332 = vmatpush1.msra.mxu0 0.0
    %333 = vmatprep.subr.mxu0 0.0
    %334 = vmatpush1.msra.mxu0 0.0
    %335 = vmatprep.subr.mxu0 0.0
    %336 = vmatpush1.msra.mxu0 0.0
    %337 = vmatprep.subr.mxu0 0.0
    %338 = vmatpush1.msra.mxu0 %v129
    %339 = vmatprep.subr.mxu0 0.0
    %340 = vmatpush1.msra.mxu0 %v124
    %341 = vmatprep.subr.mxu0 0.0
    %342 = vmatpush1.msra.mxu0 %v119
    %343 = vmatprep.subr.mxu0 0.0
    %344 = vmatpush1.msra.mxu0 %v114
    %345 = vmatprep.subr.mxu0 0.0
    %346 = vmatpush1.msra.mxu0 %v109
    %347 = vmatprep.subr.mxu0 0.0
    %348 = vmatpush1.msra.mxu0 %v104
    %349 = vmatprep.subr.mxu0 0.0
    %350 = vmatpush1.msra.mxu0 %v99
    %351 = vmatprep.subr.mxu0 0.0
    %352 = vmatpush1.msra.mxu0 %v94
    %353 = vmatprep.subr.mxu0 0.0
    %354 = vmatpush2.msra.mxu0 0.0
    %355 = vmatprep.subr.mxu0 0.0
    %356 = vmatpush2.msra.mxu0 0.0
    %357 = vmatprep.subr.mxu0 0.0
    %358 = vmatpush2.msra.mxu0 0.0
    %359 = vmatprep.subr.mxu0 0.0
    %360 = vmatpush2.msra.mxu0 0.0
    %361 = vmatprep.subr.mxu0 0.0
    %362 = vmatpush2.msra.mxu0 0.0
    %363 = vmatprep.subr.mxu0 0.0
    %364 = vmatpush2.msra.mxu0 0.0
    %365 = vmatprep.subr.mxu0 0.0
    %366 = vmatpush2.msra.mxu0 0.0
    %367 = vmatprep.subr.mxu0 0.0
    %368 = vmatpush2.msra.mxu0 0.0
    %369 = vmatprep.subr.mxu0 0.0
    %370 = vmatpush2.msra.mxu0 0.0
    %371 = vmatprep.subr.mxu0 0.0
    %372 = vmatpush2.msra.mxu0 0.0
    %373 = vmatprep.subr.mxu0 0.0
    %374 = vmatpush2.msra.mxu0 0.0
    %375 = vmatprep.subr.mxu0 0.0
    %376 = vmatpush2.msra.mxu0 0.0
    %377 = vmatprep.subr.mxu0 0.0
    %378 = vmatpush2.msra.mxu0 0.0
    %379 = vmatprep.subr.mxu0 0.0
    %380 = vmatpush2.msra.mxu0 0.0
    %381 = vmatprep.subr.mxu0 0.0
    %382 = vmatpush2.msra.mxu0 0.0
    %383 = vmatprep.subr.mxu0 0.0
    %384 = vmatpush2.msra.mxu0 0.0
    %385 = vmatprep.mubr.f32.mxu0 0.0
    %386 = vmatmul.mubr.f32.gmra.mxu0 %v132
    %v387 = vpop.f32.mrf.mxu0
    %v388 = vadd.f32 0.0, %v387
    %v389 = vpop.f32.mrf.mxu0
    %390 = vmatprep.mubr.f32.mxu0 0.0
    %391 = vmatmul.mubr.f32.gmra.mxu0 %v135
    %v392 = vpop.f32.mrf.mxu0
    %v393 = vadd.f32 0.0, %v392
    %v394 = vpop.f32.mrf.mxu0
    %395 = vmatprep.mubr.f32.mxu0 0.0
    %396 = vmatmul.mubr.f32.gmra.mxu0 %v138
    %v397 = vpop.f32.mrf.mxu0
    %v398 = vadd.f32 0.0, %v397
    %v399 = vpop.f32.mrf.mxu0
    %400 = vmatprep.mubr.f32.mxu0 0.0
    %401 = vmatmul.mubr.f32.gmra.mxu0 %v141
    %v402 = vpop.f32.mrf.mxu0
    %v403 = vadd.f32 0.0, %v402
    %v404 = vpop.f32.mrf.mxu0
    %405 = vdwg.mxu0
    %406 = vst [vmem:[#allocation2] sm:$0xff] %v210
    %407 = vst [vmem:[#allocation2 + $0x8] sm:$0xff] %v216
    %408 = vst [vmem:[#allocation2 + $0x10] sm:$0xff] %v222
    %409 = vst [vmem:[#allocation2 + $0x18] sm:$0xff] %v228
    %410 = vst [vmem:[#allocation2 + $0x20] sm:$0xff] %v212
    %411 = vst [vmem:[#allocation2 + $0x28] sm:$0xff] %v218
    %412 = vst [vmem:[#allocation2 + $0x30] sm:$0xff] %v224
    %413 = vst [vmem:[#allocation2 + $0x38] sm:$0xff] %v230
    %414 = vst [vmem:[#allocation2 + $0x40] sm:$0xff] %v299
    %415 = vst [vmem:[#allocation2 + $0x48] sm:$0xff] %v305
    %416 = vst [vmem:[#allocation2 + $0x50] sm:$0xff] %v311
    %417 = vst [vmem:[#allocation2 + $0x58] sm:$0xff] %v317
    %418 = vst [vmem:[#allocation2 + $0x60] sm:$0xff] %v301
    %419 = vst [vmem:[#allocation2 + $0x68] sm:$0xff] %v307
    %420 = vst [vmem:[#allocation2 + $0x70] sm:$0xff] %v313
    %421 = vst [vmem:[#allocation2 + $0x78] sm:$0xff] %v319
    %422 = vst [vmem:[#allocation2 + $0x80] sm:$0xff] %v388
    %423 = vst [vmem:[#allocation2 + $0x88] sm:$0xff] %v393
    %424 = vst [vmem:[#allocation2 + $0x90] sm:$0xff] %v398
    %425 = vst [vmem:[#allocation2 + $0x98] sm:$0xff] %v403
    %v426 = vld [vmem:[#allocation2] sm:$0xff]
    %v427 = vld [vmem:[#allocation2 + $0x8] sm:$0xff]
    %v428 = vld [vmem:[#allocation2 + $0x10] sm:$0xff]
    %v429 = vld [vmem:[#allocation2 + $0x18] sm:$0xff]
    %v430 = vld [vmem:[#allocation2 + $0x20] sm:$0xff]
    %v431 = vld [vmem:[#allocation2 + $0x28] sm:$0xff]
    %v432 = vld [vmem:[#allocation2 + $0x30] sm:$0xff]
    %v433 = vld [vmem:[#allocation2 + $0x38] sm:$0xff]
    %v434 = vld [vmem:[#allocation2 + $0x40] sm:$0xff]
    %v435 = vld [vmem:[#allocation2 + $0x48] sm:$0xff]
    %v436 = vld [vmem:[#allocation2 + $0x50] sm:$0xff]
    %v437 = vld [vmem:[#allocation2 + $0x58] sm:$0xff]
    %v438 = vld [vmem:[#allocation2 + $0x60] sm:$0xff]
    %v439 = vld [vmem:[#allocation2 + $0x68] sm:$0xff]
    %v440 = vld [vmem:[#allocation2 + $0x70] sm:$0xff]
    %v441 = vld [vmem:[#allocation2 + $0x78] sm:$0xff]
    %v442 = vld [vmem:[#allocation2 + $0x80] sm:$0xff]
    %v443 = vld [vmem:[#allocation2 + $0x88] sm:$0xff]
    %v444 = vld [vmem:[#allocation2 + $0x90] sm:$0xff]
    %v445 = vld [vmem:[#allocation2 + $0x98] sm:$0xff]
    %v446 = vld [vmem:[%s3] sm:$0x1]
    %v448 = vlaneseq
    %v449 = vshrl.u32 %v448, 7
    %v450 = vsub.s32 0, %v449
    %v451 = vrot.slane %v446, %v450
    %vm453 = vcmask 261120
    %v455 = vsel %vm453, %v79, 0
    %v458 = vsel %vm453, %v81, 0
    %v461 = vsel %vm453, %v83, 0
    %v464 = vsel %vm453, %v85, 0
    %466 = vmatprep.subr.mxu0 0.0
    %467 = vmatpush1.msra.mxu0 %v441
    %468 = vmatprep.subr.mxu0 0.0
    %469 = vmatpush1.msra.mxu0 %v440
    %470 = vmatprep.subr.mxu0 0.0
    %471 = vmatpush1.msra.mxu0 %v439
    %472 = vmatprep.subr.mxu0 0.0
    %473 = vmatpush1.msra.mxu0 %v438
    %474 = vmatprep.subr.mxu0 0.0
    %475 = vmatpush1.msra.mxu0 %v437
    %476 = vmatprep.subr.mxu0 0.0
    %477 = vmatpush1.msra.mxu0 %v436
    %478 = vmatprep.subr.mxu0 0.0
    %479 = vmatpush1.msra.mxu0 %v435
    %480 = vmatprep.subr.mxu0 0.0
    %481 = vmatpush1.msra.mxu0 %v434
    %482 = vmatprep.subr.mxu0 0.0
    %483 = vmatpush1.msra.mxu0 %v433
    %484 = vmatprep.subr.mxu0 0.0
    %485 = vmatpush1.msra.mxu0 %v432
    %486 = vmatprep.subr.mxu0 0.0
    %487 = vmatpush1.msra.mxu0 %v431
    %488 = vmatprep.subr.mxu0 0.0
    %489 = vmatpush1.msra.mxu0 %v430
    %490 = vmatprep.subr.mxu0 0.0
    %491 = vmatpush1.msra.mxu0 %v429
    %492 = vmatprep.subr.mxu0 0.0
    %493 = vmatpush1.msra.mxu0 %v428
    %494 = vmatprep.subr.mxu0 0.0
    %495 = vmatpush1.msra.mxu0 %v427
    %496 = vmatprep.subr.mxu0 0.0
    %497 = vmatpush1.msra.mxu0 %v426
    %498 = vmatprep.subr.mxu0 0.0
    %499 = vmatpush2.msra.mxu0 0.0
    %500 = vmatprep.subr.mxu0 0.0
    %501 = vmatpush2.msra.mxu0 0.0
    %502 = vmatprep.subr.mxu0 0.0
    %503 = vmatpush2.msra.mxu0 0.0
    %504 = vmatprep.subr.mxu0 0.0
    %505 = vmatpush2.msra.mxu0 0.0
    %506 = vmatprep.subr.mxu0 0.0
    %507 = vmatpush2.msra.mxu0 0.0
    %508 = vmatprep.subr.mxu0 0.0
    %509 = vmatpush2.msra.mxu0 0.0
    %510 = vmatprep.subr.mxu0 0.0
    %511 = vmatpush2.msra.mxu0 0.0
    %512 = vmatprep.subr.mxu0 0.0
    %513 = vmatpush2.msra.mxu0 0.0
    %514 = vmatprep.subr.mxu0 0.0
    %515 = vmatpush2.msra.mxu0 0.0
    %516 = vmatprep.subr.mxu0 0.0
    %517 = vmatpush2.msra.mxu0 0.0
    %518 = vmatprep.subr.mxu0 0.0
    %519 = vmatpush2.msra.mxu0 0.0
    %520 = vmatprep.subr.mxu0 0.0
    %521 = vmatpush2.msra.mxu0 0.0
    %522 = vmatprep.subr.mxu0 0.0
    %523 = vmatpush2.msra.mxu0 %v445
    %524 = vmatprep.subr.mxu0 0.0
    %525 = vmatpush2.msra.mxu0 %v444
    %526 = vmatprep.subr.mxu0 0.0
    %527 = vmatpush2.msra.mxu0 %v443
    %528 = vmatprep.subr.mxu0 0.0
    %529 = vmatpush2.msra.mxu0 %v442
    %530 = vmatprep.mubr.f32.mxu0 %v455
    %531 = vmatmul.mubr.f32.gmra.mxu0 %v78
    %v532 = vpop.f32.mrf.mxu0
    %v533 = vadd.f32 %v451, %v532
    %v534 = vpop.f32.mrf.mxu0
    %535 = vmatprep.mubr.f32.mxu0 %v458
    %536 = vmatmul.mubr.f32.gmra.mxu0 %v80
    %v537 = vpop.f32.mrf.mxu0
    %v538 = vadd.f32 %v451, %v537
    %v539 = vpop.f32.mrf.mxu0
    %540 = vmatprep.mubr.f32.mxu0 %v461
    %541 = vmatmul.mubr.f32.gmra.mxu0 %v82
    %v542 = vpop.f32.mrf.mxu0
    %v543 = vadd.f32 %v451, %v542
    %v544 = vpop.f32.mrf.mxu0
    %545 = vmatprep.mubr.f32.mxu0 %v464
    %546 = vmatmul.mubr.f32.gmra.mxu0 %v84
    %v547 = vpop.f32.mrf.mxu0
    %v548 = vadd.f32 %v451, %v547
    %v549 = vpop.f32.mrf.mxu0
    %550 = vdwg.mxu0
    %v551 = vmax.f32 %v533, 0.0
    %v552 = vmax.f32 %v538, 0.0
    %v553 = vmax.f32 %v543, 0.0
    %v554 = vmax.f32 %v548, 0.0
    %v555 = vld [vmem:[#allocation8] sm:$0xff]
    %v556 = vld [vmem:[#allocation8 + $0x8] sm:$0xff]
    %v557 = vld [vmem:[#allocation8 + $0x10] sm:$0xff]
    %v558 = vld [vmem:[#allocation8 + $0x18] sm:$0xff]
    %v559 = vld [vmem:[#allocation8 + $0x20] sm:$0xff]
    %v560 = vld [vmem:[#allocation8 + $0x28] sm:$0xff]
    %v561 = vld [vmem:[#allocation8 + $0x30] sm:$0xff]
    %v562 = vld [vmem:[#allocation8 + $0x38] sm:$0xff]
    %v563 = vld [vmem:[#allocation8 + $0x40] sm:$0xff]
    %v564 = vld [vmem:[#allocation8 + $0x48] sm:$0xff]
    %v565 = vld [vmem:[#allocation8 + $0x50] sm:$0xff]
    %v566 = vld [vmem:[#allocation8 + $0x58] sm:$0xff]
    %v567 = vld [vmem:[#allocation8 + $0x60] sm:$0xff]
    %v568 = vld [vmem:[#allocation8 + $0x68] sm:$0xff]
    %v569 = vld [vmem:[#allocation8 + $0x70] sm:$0xff]
    %v570 = vld [vmem:[#allocation8 + $0x78] sm:$0xff]
    %v571 = vld [vmem:[#allocation8 + $0x80] sm:$0xff]
    %v572 = vld [vmem:[#allocation8 + $0x88] sm:$0xff]
    %v573 = vld [vmem:[#allocation8 + $0x90] sm:$0xff]
    %v574 = vld [vmem:[#allocation8 + $0x98] sm:$0xff]
    %v576 = vsel %vm453, %v551, 0
    %v579 = vsel %vm453, %v552, 0
    %v582 = vsel %vm453, %v553, 0
    %v585 = vsel %vm453, %v554, 0
    %587 = vmatprep.subr.mxu0 0.0
    %588 = vmatpush1.msra.mxu0 0.0
    %589 = vmatprep.subr.mxu0 0.0
    %590 = vmatpush1.msra.mxu0 0.0
    %591 = vmatprep.subr.mxu0 0.0
    %592 = vmatpush1.msra.mxu0 0.0
    %593 = vmatprep.subr.mxu0 0.0
    %594 = vmatpush1.msra.mxu0 0.0
    %595 = vmatprep.subr.mxu0 0.0
    %596 = vmatpush1.msra.mxu0 0.0
    %597 = vmatprep.subr.mxu0 0.0
    %598 = vmatpush1.msra.mxu0 0.0
    %599 = vmatprep.subr.mxu0 0.0
    %600 = vmatpush1.msra.mxu0 0.0
    %601 = vmatprep.subr.mxu0 0.0
    %602 = vmatpush1.msra.mxu0 0.0
    %603 = vmatprep.subr.mxu0 0.0
    %604 = vmatpush1.msra.mxu0 0.0
    %605 = vmatprep.subr.mxu0 0.0
    %606 = vmatpush1.msra.mxu0 0.0
    %607 = vmatprep.subr.mxu0 0.0
    %608 = vmatpush1.msra.mxu0 0.0
    %609 = vmatprep.subr.mxu0 0.0
    %610 = vmatpush1.msra.mxu0 0.0
    %611 = vmatprep.subr.mxu0 %v571
    %612 = vmatpush1.msra.mxu0 %v570
    %613 = vmatprep.subr.mxu0 %v566
    %614 = vmatpush1.msra.mxu0 %v565
    %615 = vmatprep.subr.mxu0 %v561
    %616 = vmatpush1.msra.mxu0 %v560
    %617 = vmatprep.subr.mxu0 %v556
    %618 = vmatpush1.msra.mxu0 %v555
    %619 = vmatprep.subr.mxu0 0.0
    %620 = vmatpush2.msra.mxu0 0.0
    %621 = vmatprep.subr.mxu0 0.0
    %622 = vmatpush2.msra.mxu0 0.0
    %623 = vmatprep.subr.mxu0 0.0
    %624 = vmatpush2.msra.mxu0 0.0
    %625 = vmatprep.subr.mxu0 0.0
    %626 = vmatpush2.msra.mxu0 0.0
    %627 = vmatprep.subr.mxu0 0.0
    %628 = vmatpush2.msra.mxu0 0.0
    %629 = vmatprep.subr.mxu0 0.0
    %630 = vmatpush2.msra.mxu0 0.0
    %631 = vmatprep.subr.mxu0 0.0
    %632 = vmatpush2.msra.mxu0 0.0
    %633 = vmatprep.subr.mxu0 0.0
    %634 = vmatpush2.msra.mxu0 0.0
    %635 = vmatprep.subr.mxu0 0.0
    %636 = vmatpush2.msra.mxu0 0.0
    %637 = vmatprep.subr.mxu0 0.0
    %638 = vmatpush2.msra.mxu0 0.0
    %639 = vmatprep.subr.mxu0 0.0
    %640 = vmatpush2.msra.mxu0 0.0
    %641 = vmatprep.subr.mxu0 0.0
    %642 = vmatpush2.msra.mxu0 0.0
    %643 = vmatprep.subr.mxu0 0.0
    %644 = vmatpush2.msra.mxu0 0.0
    %645 = vmatprep.subr.mxu0 0.0
    %646 = vmatpush2.msra.mxu0 0.0
    %647 = vmatprep.subr.mxu0 0.0
    %648 = vmatpush2.msra.mxu0 0.0
    %649 = vmatprep.subr.mxu0 0.0
    %650 = vmatpush2.msra.mxu0 0.0
    %651 = vmatprep.mubr.f32.mxu0 0.0
    %652 = vmatmul.mubr.f32.gmra.mxu0 %v576
    %v653 = vpop.f32.mrf.mxu0
    %v654 = vadd.f32 0.0, %v653
    %v655 = vpop.f32.mrf.mxu0
    %v656 = vadd.f32 0.0, %v655
    %657 = vmatprep.mubr.f32.mxu0 0.0
    %658 = vmatmul.mubr.f32.gmra.mxu0 %v579
    %v659 = vpop.f32.mrf.mxu0
    %v660 = vadd.f32 0.0, %v659
    %v661 = vpop.f32.mrf.mxu0
    %v662 = vadd.f32 0.0, %v661
    %663 = vmatprep.mubr.f32.mxu0 0.0
    %664 = vmatmul.mubr.f32.gmra.mxu0 %v582
    %v665 = vpop.f32.mrf.mxu0
    %v666 = vadd.f32 0.0, %v665
    %v667 = vpop.f32.mrf.mxu0
    %v668 = vadd.f32 0.0, %v667
    %669 = vmatprep.mubr.f32.mxu0 0.0
    %670 = vmatmul.mubr.f32.gmra.mxu0 %v585
    %v671 = vpop.f32.mrf.mxu0
    %v672 = vadd.f32 0.0, %v671
    %v673 = vpop.f32.mrf.mxu0
    %v674 = vadd.f32 0.0, %v673
    %675 = vdwg.mxu0
    %676 = vmatprep.subr.mxu0 0.0
    %677 = vmatpush1.msra.mxu0 0.0
    %678 = vmatprep.subr.mxu0 0.0
    %679 = vmatpush1.msra.mxu0 0.0
    %680 = vmatprep.subr.mxu0 0.0
    %681 = vmatpush1.msra.mxu0 0.0
    %682 = vmatprep.subr.mxu0 0.0
    %683 = vmatpush1.msra.mxu0 0.0
    %684 = vmatprep.subr.mxu0 0.0
    %685 = vmatpush1.msra.mxu0 0.0
    %686 = vmatprep.subr.mxu0 0.0
    %687 = vmatpush1.msra.mxu0 0.0
    %688 = vmatprep.subr.mxu0 0.0
    %689 = vmatpush1.msra.mxu0 0.0
    %690 = vmatprep.subr.mxu0 0.0
    %691 = vmatpush1.msra.mxu0 0.0
    %692 = vmatprep.subr.mxu0 0.0
    %693 = vmatpush1.msra.mxu0 0.0
    %694 = vmatprep.subr.mxu0 0.0
    %695 = vmatpush1.msra.mxu0 0.0
    %696 = vmatprep.subr.mxu0 0.0
    %697 = vmatpush1.msra.mxu0 0.0
    %698 = vmatprep.subr.mxu0 0.0
    %699 = vmatpush1.msra.mxu0 0.0
    %700 = vmatprep.subr.mxu0 %v573
    %701 = vmatpush1.msra.mxu0 %v572
    %702 = vmatprep.subr.mxu0 %v568
    %703 = vmatpush1.msra.mxu0 %v567
    %704 = vmatprep.subr.mxu0 %v563
    %705 = vmatpush1.msra.mxu0 %v562
    %706 = vmatprep.subr.mxu0 %v558
    %707 = vmatpush1.msra.mxu0 %v557
    %708 = vmatprep.subr.mxu0 0.0
    %709 = vmatpush2.msra.mxu0 0.0
    %710 = vmatprep.subr.mxu0 0.0
    %711 = vmatpush2.msra.mxu0 0.0
    %712 = vmatprep.subr.mxu0 0.0
    %713 = vmatpush2.msra.mxu0 0.0
    %714 = vmatprep.subr.mxu0 0.0
    %715 = vmatpush2.msra.mxu0 0.0
    %716 = vmatprep.subr.mxu0 0.0
    %717 = vmatpush2.msra.mxu0 0.0
    %718 = vmatprep.subr.mxu0 0.0
    %719 = vmatpush2.msra.mxu0 0.0
    %720 = vmatprep.subr.mxu0 0.0
    %721 = vmatpush2.msra.mxu0 0.0
    %722 = vmatprep.subr.mxu0 0.0
    %723 = vmatpush2.msra.mxu0 0.0
    %724 = vmatprep.subr.mxu0 0.0
    %725 = vmatpush2.msra.mxu0 0.0
    %726 = vmatprep.subr.mxu0 0.0
    %727 = vmatpush2.msra.mxu0 0.0
    %728 = vmatprep.subr.mxu0 0.0
    %729 = vmatpush2.msra.mxu0 0.0
    %730 = vmatprep.subr.mxu0 0.0
    %731 = vmatpush2.msra.mxu0 0.0
    %732 = vmatprep.subr.mxu0 0.0
    %733 = vmatpush2.msra.mxu0 0.0
    %734 = vmatprep.subr.mxu0 0.0
    %735 = vmatpush2.msra.mxu0 0.0
    %736 = vmatprep.subr.mxu0 0.0
    %737 = vmatpush2.msra.mxu0 0.0
    %738 = vmatprep.subr.mxu0 0.0
    %739 = vmatpush2.msra.mxu0 0.0
    %740 = vmatprep.mubr.f32.mxu0 0.0
    %741 = vmatmul.mubr.f32.gmra.mxu0 %v576
    %v742 = vpop.f32.mrf.mxu0
    %v743 = vadd.f32 0.0, %v742
    %v744 = vpop.f32.mrf.mxu0
    %v745 = vadd.f32 0.0, %v744
    %746 = vmatprep.mubr.f32.mxu0 0.0
    %747 = vmatmul.mubr.f32.gmra.mxu0 %v579
    %v748 = vpop.f32.mrf.mxu0
    %v749 = vadd.f32 0.0, %v748
    %v750 = vpop.f32.mrf.mxu0
    %v751 = vadd.f32 0.0, %v750
    %752 = vmatprep.mubr.f32.mxu0 0.0
    %753 = vmatmul.mubr.f32.gmra.mxu0 %v582
    %v754 = vpop.f32.mrf.mxu0
    %v755 = vadd.f32 0.0, %v754
    %v756 = vpop.f32.mrf.mxu0
    %v757 = vadd.f32 0.0, %v756
    %758 = vmatprep.mubr.f32.mxu0 0.0
    %759 = vmatmul.mubr.f32.gmra.mxu0 %v585
    %v760 = vpop.f32.mrf.mxu0
    %v761 = vadd.f32 0.0, %v760
    %v762 = vpop.f32.mrf.mxu0
    %v763 = vadd.f32 0.0, %v762
    %764 = vdwg.mxu0
    %765 = vmatprep.subr.mxu0 0.0
    %766 = vmatpush1.msra.mxu0 0.0
    %767 = vmatprep.subr.mxu0 0.0
    %768 = vmatpush1.msra.mxu0 0.0
    %769 = vmatprep.subr.mxu0 0.0
    %770 = vmatpush1.msra.mxu0 0.0
    %771 = vmatprep.subr.mxu0 0.0
    %772 = vmatpush1.msra.mxu0 0.0
    %773 = vmatprep.subr.mxu0 0.0
    %774 = vmatpush1.msra.mxu0 0.0
    %775 = vmatprep.subr.mxu0 0.0
    %776 = vmatpush1.msra.mxu0 0.0
    %777 = vmatprep.subr.mxu0 0.0
    %778 = vmatpush1.msra.mxu0 0.0
    %779 = vmatprep.subr.mxu0 0.0
    %780 = vmatpush1.msra.mxu0 0.0
    %781 = vmatprep.subr.mxu0 0.0
    %782 = vmatpush1.msra.mxu0 0.0
    %783 = vmatprep.subr.mxu0 0.0
    %784 = vmatpush1.msra.mxu0 0.0
    %785 = vmatprep.subr.mxu0 0.0
    %786 = vmatpush1.msra.mxu0 0.0
    %787 = vmatprep.subr.mxu0 0.0
    %788 = vmatpush1.msra.mxu0 0.0
    %789 = vmatprep.subr.mxu0 0.0
    %790 = vmatpush1.msra.mxu0 %v574
    %791 = vmatprep.subr.mxu0 0.0
    %792 = vmatpush1.msra.mxu0 %v569
    %793 = vmatprep.subr.mxu0 0.0
    %794 = vmatpush1.msra.mxu0 %v564
    %795 = vmatprep.subr.mxu0 0.0
    %796 = vmatpush1.msra.mxu0 %v559
    %797 = vmatprep.subr.mxu0 0.0
    %798 = vmatpush2.msra.mxu0 0.0
    %799 = vmatprep.subr.mxu0 0.0
    %800 = vmatpush2.msra.mxu0 0.0
    %801 = vmatprep.subr.mxu0 0.0
    %802 = vmatpush2.msra.mxu0 0.0
    %803 = vmatprep.subr.mxu0 0.0
    %804 = vmatpush2.msra.mxu0 0.0
    %805 = vmatprep.subr.mxu0 0.0
    %806 = vmatpush2.msra.mxu0 0.0
    %807 = vmatprep.subr.mxu0 0.0
    %808 = vmatpush2.msra.mxu0 0.0
    %809 = vmatprep.subr.mxu0 0.0
    %810 = vmatpush2.msra.mxu0 0.0
    %811 = vmatprep.subr.mxu0 0.0
    %812 = vmatpush2.msra.mxu0 0.0
    %813 = vmatprep.subr.mxu0 0.0
    %814 = vmatpush2.msra.mxu0 0.0
    %815 = vmatprep.subr.mxu0 0.0
    %816 = vmatpush2.msra.mxu0 0.0
    %817 = vmatprep.subr.mxu0 0.0
    %818 = vmatpush2.msra.mxu0 0.0
    %819 = vmatprep.subr.mxu0 0.0
    %820 = vmatpush2.msra.mxu0 0.0
    %821 = vmatprep.subr.mxu0 0.0
    %822 = vmatpush2.msra.mxu0 0.0
    %823 = vmatprep.subr.mxu0 0.0
    %824 = vmatpush2.msra.mxu0 0.0
    %825 = vmatprep.subr.mxu0 0.0
    %826 = vmatpush2.msra.mxu0 0.0
    %827 = vmatprep.subr.mxu0 0.0
    %828 = vmatpush2.msra.mxu0 0.0
    %829 = vmatprep.mubr.f32.mxu0 0.0
    %830 = vmatmul.mubr.f32.gmra.mxu0 %v576
    %v831 = vpop.f32.mrf.mxu0
    %v832 = vadd.f32 0.0, %v831
    %v833 = vpop.f32.mrf.mxu0
    %834 = vmatprep.mubr.f32.mxu0 0.0
    %835 = vmatmul.mubr.f32.gmra.mxu0 %v579
    %v836 = vpop.f32.mrf.mxu0
    %v837 = vadd.f32 0.0, %v836
    %v838 = vpop.f32.mrf.mxu0
    %839 = vmatprep.mubr.f32.mxu0 0.0
    %840 = vmatmul.mubr.f32.gmra.mxu0 %v582
    %v841 = vpop.f32.mrf.mxu0
    %v842 = vadd.f32 0.0, %v841
    %v843 = vpop.f32.mrf.mxu0
    %844 = vmatprep.mubr.f32.mxu0 0.0
    %845 = vmatmul.mubr.f32.gmra.mxu0 %v585
    %v846 = vpop.f32.mrf.mxu0
    %v847 = vadd.f32 0.0, %v846
    %v848 = vpop.f32.mrf.mxu0
    %849 = vdwg.mxu0
    %850 = vst [vmem:[#allocation2] sm:$0xff] %v654
    %851 = vst [vmem:[#allocation2 + $0x8] sm:$0xff] %v660
    %852 = vst [vmem:[#allocation2 + $0x10] sm:$0xff] %v666
    %853 = vst [vmem:[#allocation2 + $0x18] sm:$0xff] %v672
    %854 = vst [vmem:[#allocation2 + $0x20] sm:$0xff] %v656
    %855 = vst [vmem:[#allocation2 + $0x28] sm:$0xff] %v662
    %856 = vst [vmem:[#allocation2 + $0x30] sm:$0xff] %v668
    %857 = vst [vmem:[#allocation2 + $0x38] sm:$0xff] %v674
    %858 = vst [vmem:[#allocation2 + $0x40] sm:$0xff] %v743
    %859 = vst [vmem:[#allocation2 + $0x48] sm:$0xff] %v749
    %860 = vst [vmem:[#allocation2 + $0x50] sm:$0xff] %v755
    %861 = vst [vmem:[#allocation2 + $0x58] sm:$0xff] %v761
    %862 = vst [vmem:[#allocation2 + $0x60] sm:$0xff] %v745
    %863 = vst [vmem:[#allocation2 + $0x68] sm:$0xff] %v751
    %864 = vst [vmem:[#allocation2 + $0x70] sm:$0xff] %v757
    %865 = vst [vmem:[#allocation2 + $0x78] sm:$0xff] %v763
    %866 = vst [vmem:[#allocation2 + $0x80] sm:$0xff] %v832
    %867 = vst [vmem:[#allocation2 + $0x88] sm:$0xff] %v837
    %868 = vst [vmem:[#allocation2 + $0x90] sm:$0xff] %v842
    %869 = vst [vmem:[#allocation2 + $0x98] sm:$0xff] %v847
    %v870 = vld [vmem:[#allocation2] sm:$0xff]
    %v871 = vld [vmem:[#allocation2 + $0x8] sm:$0xff]
    %v872 = vld [vmem:[#allocation2 + $0x10] sm:$0xff]
    %v873 = vld [vmem:[#allocation2 + $0x18] sm:$0xff]
    %v874 = vld [vmem:[#allocation2 + $0x20] sm:$0xff]
    %v875 = vld [vmem:[#allocation2 + $0x28] sm:$0xff]
    %v876 = vld [vmem:[#allocation2 + $0x30] sm:$0xff]
    %v877 = vld [vmem:[#allocation2 + $0x38] sm:$0xff]
    %v878 = vld [vmem:[#allocation2 + $0x40] sm:$0xff]
    %v879 = vld [vmem:[#allocation2 + $0x48] sm:$0xff]
    %v880 = vld [vmem:[#allocation2 + $0x50] sm:$0xff]
    %v881 = vld [vmem:[#allocation2 + $0x58] sm:$0xff]
    %v882 = vld [vmem:[#allocation2 + $0x60] sm:$0xff]
    %v883 = vld [vmem:[#allocation2 + $0x68] sm:$0xff]
    %v884 = vld [vmem:[#allocation2 + $0x70] sm:$0xff]
    %v885 = vld [vmem:[#allocation2 + $0x78] sm:$0xff]
    %v886 = vld [vmem:[#allocation2 + $0x80] sm:$0xff]
    %v887 = vld [vmem:[#allocation2 + $0x88] sm:$0xff]
    %v888 = vld [vmem:[#allocation2 + $0x90] sm:$0xff]
    %v889 = vld [vmem:[#allocation2 + $0x98] sm:$0xff]
    %v890 = vld [vmem:[%s5] sm:$0x1]
    %v892 = vlaneseq
    %v893 = vshrl.u32 %v892, 7
    %v894 = vsub.s32 0, %v893
    %v895 = vrot.slane %v890, %v894
    %897 = vmatprep.subr.mxu0 0.0
    %898 = vmatpush1.msra.mxu0 %v885
    %899 = vmatprep.subr.mxu0 0.0
    %900 = vmatpush1.msra.mxu0 %v884
    %901 = vmatprep.subr.mxu0 0.0
    %902 = vmatpush1.msra.mxu0 %v883
    %903 = vmatprep.subr.mxu0 0.0
    %904 = vmatpush1.msra.mxu0 %v882
    %905 = vmatprep.subr.mxu0 0.0
    %906 = vmatpush1.msra.mxu0 %v881
    %907 = vmatprep.subr.mxu0 0.0
    %908 = vmatpush1.msra.mxu0 %v880
    %909 = vmatprep.subr.mxu0 0.0
    %910 = vmatpush1.msra.mxu0 %v879
    %911 = vmatprep.subr.mxu0 0.0
    %912 = vmatpush1.msra.mxu0 %v878
    %913 = vmatprep.subr.mxu0 0.0
    %914 = vmatpush1.msra.mxu0 %v877
    %915 = vmatprep.subr.mxu0 0.0
    %916 = vmatpush1.msra.mxu0 %v876
    %917 = vmatprep.subr.mxu0 0.0
    %918 = vmatpush1.msra.mxu0 %v875
    %919 = vmatprep.subr.mxu0 0.0
    %920 = vmatpush1.msra.mxu0 %v874
    %921 = vmatprep.subr.mxu0 0.0
    %922 = vmatpush1.msra.mxu0 %v873
    %923 = vmatprep.subr.mxu0 0.0
    %924 = vmatpush1.msra.mxu0 %v872
    %925 = vmatprep.subr.mxu0 0.0
    %926 = vmatpush1.msra.mxu0 %v871
    %927 = vmatprep.subr.mxu0 0.0
    %928 = vmatpush1.msra.mxu0 %v870
    %929 = vmatprep.subr.mxu0 0.0
    %930 = vmatpush2.msra.mxu0 0.0
    %931 = vmatprep.subr.mxu0 0.0
    %932 = vmatpush2.msra.mxu0 0.0
    %933 = vmatprep.subr.mxu0 0.0
    %934 = vmatpush2.msra.mxu0 0.0
    %935 = vmatprep.subr.mxu0 0.0
    %936 = vmatpush2.msra.mxu0 0.0
    %937 = vmatprep.subr.mxu0 0.0
    %938 = vmatpush2.msra.mxu0 0.0
    %939 = vmatprep.subr.mxu0 0.0
    %940 = vmatpush2.msra.mxu0 0.0
    %941 = vmatprep.subr.mxu0 0.0
    %942 = vmatpush2.msra.mxu0 0.0
    %943 = vmatprep.subr.mxu0 0.0
    %944 = vmatpush2.msra.mxu0 0.0
    %945 = vmatprep.subr.mxu0 0.0
    %946 = vmatpush2.msra.mxu0 0.0
    %947 = vmatprep.subr.mxu0 0.0
    %948 = vmatpush2.msra.mxu0 0.0
    %949 = vmatprep.subr.mxu0 0.0
    %950 = vmatpush2.msra.mxu0 0.0
    %951 = vmatprep.subr.mxu0 0.0
    %952 = vmatpush2.msra.mxu0 0.0
    %953 = vmatprep.subr.mxu0 0.0
    %954 = vmatpush2.msra.mxu0 %v889
    %955 = vmatprep.subr.mxu0 0.0
    %956 = vmatpush2.msra.mxu0 %v888
    %957 = vmatprep.subr.mxu0 0.0
    %958 = vmatpush2.msra.mxu0 %v887
    %959 = vmatprep.subr.mxu0 0.0
    %960 = vmatpush2.msra.mxu0 %v886
    %961 = vmatprep.mubr.f32.mxu0 %v455
    %962 = vmatmul.mubr.f32.gmra.mxu0 %v78
    %v963 = vpop.f32.mrf.mxu0
    %v964 = vadd.f32 %v895, %v963
    %v965 = vpop.f32.mrf.mxu0
    %966 = vmatprep.mubr.f32.mxu0 %v458
    %967 = vmatmul.mubr.f32.gmra.mxu0 %v80
    %v968 = vpop.f32.mrf.mxu0
    %v969 = vadd.f32 %v895, %v968
    %v970 = vpop.f32.mrf.mxu0
    %971 = vmatprep.mubr.f32.mxu0 %v461
    %972 = vmatmul.mubr.f32.gmra.mxu0 %v82
    %v973 = vpop.f32.mrf.mxu0
    %v974 = vadd.f32 %v895, %v973
    %v975 = vpop.f32.mrf.mxu0
    %976 = vmatprep.mubr.f32.mxu0 %v464
    %977 = vmatmul.mubr.f32.gmra.mxu0 %v84
    %v978 = vpop.f32.mrf.mxu0
    %v979 = vadd.f32 %v895, %v978
    %v980 = vpop.f32.mrf.mxu0
    %981 = vdwg.mxu0
    %982 = vst [vmem:[%s6] sm:$0xff] %v964
    %983 = vst [vmem:[%s6 + $0x8] sm:$0xff] %v969
    %984 = vst [vmem:[%s6 + $0x10] sm:$0xff] %v974
    %985 = vst [vmem:[%s6 + $0x18] sm:$0xff] %v979
    // Predicated region
    $region42: #{rgcn_forward.1} parent=1 // pred_check
      _
    $region43: #{rgcn_forward.1} parent=1 // pred_check_branch
      %987 = sbr.rel (0) target = $region45
    $region44: #{rgcn_forward.1} parent=1 // pred_region
      _
    $region45: #{rgcn_forward.1} parent=1 // pred_fallthru
      _
    // Predicated region
    $region46: #{rgcn_forward.1} parent=1 // pred_check
      _
    $region47: #{rgcn_forward.1} parent=1 // pred_check_branch
      %989 = sbr.rel (0) target = $region49
    $region48: #{rgcn_forward.1} parent=1 // pred_region
      _
    $region49: #{rgcn_forward.1} parent=1 // pred_fallthru
      _
    %990 = vsyncpa [#allocation4], 1
    %991 = vsyncpa [#allocation6], 1
    %992 = vsyncpa [#allocation9], 1

</llo_original>
